<compile_context>
chip_gen: v7x
topology: tpu7x:2x2x1
jax: 0.10.0
libtpu: 0.0.40
codegen_flags: <defaults>
</compile_context>

<pallas_src>
from functools import partial

import jax
import jax.numpy as jnp
from jax.experimental import pallas as pl
from jax.experimental.pallas import tpu as pltpu

LANES = 128
CHARBONNIER_EPS = 1e-3


def _round_up(x: int, m: int) -> int:
    return ((x + m - 1) // m) * m


def _sublane_multiple(dtype) -> int:
    bits = jnp.dtype(dtype).itemsize * 8
    return max(8, 256 // bits)        # 8 (32-bit), 16 (16-bit), 32 (8-bit)


def _device_kind() -> str:
    try:
        return str(getattr(jax.devices()[0], "device_kind", "")).lower()
    except Exception:  # pragma: no cover - defensive
        return ""


# ---------------------------------------------------------------------------
# Pallas kernel: accumulate the three raw reduction sums across the grid.
# Grid = (core_split, row_tile); the three outputs are resident (8,128) f32
# accumulators per split, reduced to scalars in the wrapper.
# ---------------------------------------------------------------------------
def _loss_sums_kernel(pred_ref, tgt_ref, sq_ref, ab_ref, ch_ref, *,
                      tile_rows, tiles_per_split, last_tile, valid_rows_last):
    j = pl.program_id(1)

    @pl.when(j == 0)
    def _init():
        sq_ref[...] = jnp.zeros_like(sq_ref)
        ab_ref[...] = jnp.zeros_like(ab_ref)
        ch_ref[...] = jnp.zeros_like(ch_ref)

    p = pred_ref[...].astype(jnp.float32)
    t = tgt_ref[...].astype(jnp.float32)
    d = p - t
    eps2 = jnp.float32(CHARBONNIER_EPS) ** 2

    def fold(x):
        # (tile_rows, 128) -> (8, 128) with VPU adds only (no cross-lane work).
        return jnp.sum(x.reshape(-1, 8, LANES), axis=0)

    has_partial_tile = valid_rows_last != tile_rows   # static Python bool

    if not has_partial_tile:
        # Fast path only: no masking anywhere.
        d2 = d * d
        sq_ref[...] += fold(d2)
        ab_ref[...] += fold(jnp.abs(d))
        ch_ref[...] += fold(jnp.sqrt(d2 + eps2))
    else:
        logical_tile = pl.program_id(0) * tiles_per_split + j
        is_tail = logical_tile == last_tile

        @pl.when(jnp.logical_not(is_tail))
        def _fast():
            d2 = d * d
            sq_ref[...] += fold(d2)
            ab_ref[...] += fold(jnp.abs(d))
            ch_ref[...] += fold(jnp.sqrt(d2 + eps2))

        @pl.when(is_tail)
        def _tail():
            # The last block over-reads past `rows`; Pallas leaves the OOB part
            # of the VMEM block unspecified, so mask d BEFORE squaring.
            row = jax.lax.broadcasted_iota(jnp.int32, (tile_rows, LANES), 0)
            mask = row < valid_rows_last
            dm = jnp.where(mask, d, 0.0)
            d2 = dm * dm
            sq_ref[...] += fold(d2)
            ab_ref[...] += fold(jnp.abs(dm))
            ch_ref[...] += fold(jnp.where(mask, jnp.sqrt(d2 + eps2), 0.0))


# ---------------------------------------------------------------------------
# Wrapper: returns (sq_sum, abs_sum, char_sum, n_elements).
# ---------------------------------------------------------------------------
def _loss_sums(pred: jax.Array, target: jax.Array):
    assert pred.shape == target.shape
    n = pred.size
    pf = pred.reshape(-1)
    tf = target.reshape(-1)

    eps2 = jnp.float32(CHARBONNIER_EPS) ** 2
    rem = n % LANES
    n_main = n - rem
    rows = n_main // LANES

    # <128-element remainder summed in plain JAX on a tiny slice
    # (no full-array pad/copy of the inputs).
    if rem:
        tp = pf[n_main:].astype(jnp.float32)
        tt = tf[n_main:].astype(jnp.float32)
        td = tp - tt
        sq = jnp.sum(td * td)
        ab = jnp.sum(jnp.abs(td))
        ch = jnp.sum(jnp.sqrt(td * td + eps2))
    else:
        sq = jnp.float32(0.0)
        ab = jnp.float32(0.0)
        ch = jnp.float32(0.0)

    if rows == 0:
        return sq, ab, ch, n

    # Lane-aligned prefix streamed by the kernel as a (rows, 128) view.
    # TODO(synk): when rem != 0 the prefix slice still costs one device copy;
    # a fully zero-copy path would need 1D blocks over the unpadded buffer.
    if rem:
        pf2 = pf[:n_main].reshape(rows, LANES)
        tf2 = tf[:n_main].reshape(rows, LANES)
    else:
        pf2 = pf.reshape(rows, LANES)
        tf2 = tf.reshape(rows, LANES)

    # Chip-aware tiling. Row count is sized off the f32 working set (compute
    # temporaries dominate VMEM), so bf16 inputs share the same row tile.
    kind = _device_kind()
    is_v7 = "v7" in kind
    is_v6 = "v6" in kind
    if is_v7:
        chip_rows, vmem_limit = 8192, 48 << 20   # 4 MiB f32 blocks, raised limit
    elif is_v6:
        chip_rows, vmem_limit = 4096, None       # 2 MiB f32 blocks
    else:                                        # v5e / unknown: 16 MiB scoped VMEM
        chip_rows, vmem_limit = 2048, None       # 1 MiB f32 blocks

    sub = max(_sublane_multiple(pred.dtype), _sublane_multiple(target.dtype))
    tile_rows = max(sub, (chip_rows // sub) * sub)
    tile_rows = min(tile_rows, _round_up(rows, sub))
    row_tiles = pl.cdiv(rows, tile_rows)

    # Two-way TensorCore split only on dual-TC chips, and only when it divides
    # the tile count exactly (no clamped / duplicated tiles).
    num_splits = 1
    if is_v7 and row_tiles >= 2:
        if row_tiles % 2 == 0:
            num_splits = 2
        else:
            alt_rows = max(sub, (pl.cdiv(rows, row_tiles + 1) // sub + 1) * sub)
            alt_rows = min(alt_rows, tile_rows)
            alt_tiles = pl.cdiv(rows, alt_rows)
            if alt_tiles >= 2 and alt_tiles % 2 == 0:
                tile_rows, row_tiles, num_splits = alt_rows, alt_tiles, 2
    tiles_per_split = row_tiles // num_splits

    valid_rows_last = rows - (row_tiles - 1) * tile_rows   # static

    kernel = partial(
        _loss_sums_kernel,
        tile_rows=tile_rows,
        tiles_per_split=tiles_per_split,
        last_tile=row_tiles - 1,
        valid_rows_last=valid_rows_last,
    )

    def in_map(s, j):
        return (s * tiles_per_split + j, 0)

    acc_spec = pl.BlockSpec((None, 8, LANES), lambda s, j: (s, 0, 0))
    out_shape = tuple(
        jax.ShapeDtypeStruct((num_splits, 8, LANES), jnp.float32)
        for _ in range(3))

    sq_p, ab_p, ch_p = pl.pallas_call(
        kernel,
        out_shape=out_shape,
        grid_spec=pltpu.PrefetchScalarGridSpec(
            num_scalar_prefetch=0,
            grid=(num_splits, tiles_per_split),
            in_specs=[
                pl.BlockSpec((tile_rows, LANES), in_map),
                pl.BlockSpec((tile_rows, LANES), in_map),
            ],
            out_specs=[acc_spec, acc_spec, acc_spec],
        ),
        compiler_params=pltpu.CompilerParams(
            dimension_semantics=("parallel", "arbitrary"),
            vmem_limit_bytes=vmem_limit,
        ),
    )(pf2, tf2)

    # Final tiny cross-lane reductions of the (splits, 8, 128) partials.
    return sq + jnp.sum(sq_p), ab + jnp.sum(ab_p), ch + jnp.sum(ch_p), n


# ---------------------------------------------------------------------------
# ModularLossManager equivalent (weights normalized as in _normalize_weights).
# ---------------------------------------------------------------------------
class ModularLossManager:
    """JAX/Pallas version of the PyTorch ModularLossManager with a fixed
    registry of three elementwise losses (MSE, MAE, Charbonnier)."""

    def __init__(self, normalize_weights: bool = True):
        self.normalize_weights = normalize_weights
        self.weights = {"mse": 1.0, "mae": 0.5, "charbonnier": 0.25}
        if normalize_weights:
            self._normalize()

    def _normalize(self):
        total = sum(self.weights.values())
        if total > 0:
            self.weights = {k: v / total for k, v in self.weights.items()}

    def get_weights(self):
        return dict(self.weights)

    def set_weights(self, weights):
        for name, w in weights.items():
            if name in self.weights:
                self.weights[name] = float(w)
        if self.normalize_weights:
            self._normalize()

    def __call__(self, pred: jax.Array, target: jax.Array):
        sq_sum, ab_sum, ch_sum, n = _loss_sums(pred, target)
        inv_n = jnp.float32(1.0 / n)
        losses = {
            "mse": self.weights["mse"] * sq_sum * inv_n,
            "mae": self.weights["mae"] * ab_sum * inv_n,
            "charbonnier": self.weights["charbonnier"] * ch_sum * inv_n,
        }
        total = jnp.asarray(0.0, jnp.float32)
        for v in losses.values():
            total = total + v
        losses["total"] = total
        return losses


# ---------------------------------------------------------------------------
# Reference (pure JAX) for a sanity check.
# ---------------------------------------------------------------------------
def _reference(manager, pred, target):
    p = pred.astype(jnp.float32)
    t = target.astype(jnp.float32)
    d = p - t
    mse = jnp.mean(d * d)
    mae = jnp.mean(jnp.abs(d))
    charb = jnp.mean(jnp.sqrt(d * d + jnp.float32(CHARBONNIER_EPS) ** 2))
    out = {
        "mse": manager.weights["mse"] * mse,
        "mae": manager.weights["mae"] * mae,
        "charbonnier": manager.weights["charbonnier"] * charb,
    }
    out["total"] = out["mse"] + out["mae"] + out["charbonnier"]
    return out


if __name__ == "__main__":
    key = jax.random.PRNGKey(0)
    manager = ModularLossManager(normalize_weights=True)

    def check(pred, target, tag):
        losses = manager(pred, target)
        losses = jax.tree_util.tree_map(jax.block_until_ready, losses)
        ref = _reference(manager, pred, target)
        for name in ("mse", "mae", "charbonnier", "total"):
            a, b = float(losses[name]), float(ref[name])
            assert abs(a - b) < 1e-4 * max(1.0, abs(b)), (tag, name, a, b)

    ks = jax.random.split(key, 8)

    # Primary: small NCHW inputs, as in the PyTorch module's pred/target.
    pred = jax.random.normal(ks[0], (2, 4, 16, 16), dtype=jnp.float32)
    target = jax.random.normal(ks[1], (2, 4, 16, 16), dtype=jnp.float32)
    check(pred, target, "nchw_f32")

    # bf16 inputs streamed natively (no wrapper upcast).
    check(pred.astype(jnp.bfloat16), target.astype(jnp.bfloat16), "nchw_bf16")

    # Odd element count -> JAX lane-tail + masked partial row tile.
    p_odd = jax.random.normal(ks[2], (3, 3, 7, 5), dtype=jnp.float32)
    t_odd = jax.random.normal(ks[3], (3, 3, 7, 5), dtype=jnp.float32)
    check(p_odd, t_odd, "odd_tail")

    # Lane-aligned but rows not a multiple of the sublane tile -> masked tail
    # tile while every interior tile takes the unmasked fast path.
    p_rag = jax.random.normal(ks[4], (130, 128), dtype=jnp.float32)
    t_rag = jax.random.normal(ks[5], (130, 128), dtype=jnp.float32)
    check(p_rag, t_rag, "ragged_rows")

    # Larger input -> multi-tile accumulation (and 2-way TC split on v7x).
    p_big = jax.random.normal(ks[6], (8, 8, 192, 128), dtype=jnp.float32)
    t_big = jax.random.normal(ks[7], (8, 8, 192, 128), dtype=jnp.float32)
    check(p_big, t_big, "multi_tile")

    print("KERNEL_OK")
</pallas_src>

<mosaic_0001>
module attributes {stable_mosaic.version = 11 : i64} {
  func.func @_loss_sums_kernel(%arg0: i32, %arg1: i32, %arg2: memref<16x128xf32, #tpu.memory_space<vmem>>, %arg3: memref<16x128xf32, #tpu.memory_space<vmem>>, %arg4: memref<1x8x128xf32, #tpu.memory_space<vmem>>, %arg5: memref<1x8x128xf32, #tpu.memory_space<vmem>>, %arg6: memref<1x8x128xf32, #tpu.memory_space<vmem>>) attributes {dimension_semantics = [#tpu.dimension_semantics<parallel>, #tpu.dimension_semantics<arbitrary>], iteration_bounds = array<i64: 1, 1>, scalar_prefetch = 0 : i64, scratch_operands = 0 : i64, tpu.core_type = #tpu.core_type<tc>, window_params = [{transform_indices = @transform_0, window_bounds = array<i64: 16, 128>}, {transform_indices = @transform_1, window_bounds = array<i64: 16, 128>}, {transform_indices = @transform_2, window_bounds = array<i64: 1, 8, 128>}, {transform_indices = @transform_3, window_bounds = array<i64: 1, 8, 128>}, {transform_indices = @transform_4, window_bounds = array<i64: 1, 8, 128>}]} {
    %c0_i32 = arith.constant 0 : i32
    %0 = arith.cmpi eq, %arg1, %c0_i32 : i32
    %1 = arith.extui %0 : i1 to i32
    %c0_i32_0 = arith.constant 0 : i32
    %2 = arith.cmpi ne, %1, %c0_i32_0 : i32
    scf.if %2 {
      %cst_25 = arith.constant 0.000000e+00 : f32
      %36 = vector.broadcast %cst_25 : f32 to vector<8x128xf32>
      %c0_26 = arith.constant 0 : index
      %c0_27 = arith.constant 0 : index
      %c0_28 = arith.constant 0 : index
      %37 = vector.load %arg4[%c0_26, %c0_27, %c0_28] : memref<1x8x128xf32, #tpu.memory_space<vmem>>, vector<1x8x128xf32>
      %38 = vector.shape_cast %37 : vector<1x8x128xf32> to vector<8x128xf32>
      %39 = vector.shape_cast %36 : vector<8x128xf32> to vector<1x8x128xf32>
      tpu.vector_store %arg4[%c0_26, %c0_27, %c0_28], %39 {strides = array<i32>} : memref<1x8x128xf32, #tpu.memory_space<vmem>>, vector<1x8x128xf32>,
      %cst_29 = arith.constant 0.000000e+00 : f32
      %40 = vector.broadcast %cst_29 : f32 to vector<8x128xf32>
      %c0_30 = arith.constant 0 : index
      %c0_31 = arith.constant 0 : index
      %c0_32 = arith.constant 0 : index
      %41 = vector.load %arg5[%c0_30, %c0_31, %c0_32] : memref<1x8x128xf32, #tpu.memory_space<vmem>>, vector<1x8x128xf32>
      %42 = vector.shape_cast %41 : vector<1x8x128xf32> to vector<8x128xf32>
      %43 = vector.shape_cast %40 : vector<8x128xf32> to vector<1x8x128xf32>
      tpu.vector_store %arg5[%c0_30, %c0_31, %c0_32], %43 {strides = array<i32>} : memref<1x8x128xf32, #tpu.memory_space<vmem>>, vector<1x8x128xf32>,
      %cst_33 = arith.constant 0.000000e+00 : f32
      %44 = vector.broadcast %cst_33 : f32 to vector<8x128xf32>
      %c0_34 = arith.constant 0 : index
      %c0_35 = arith.constant 0 : index
      %c0_36 = arith.constant 0 : index
      %45 = vector.load %arg6[%c0_34, %c0_35, %c0_36] : memref<1x8x128xf32, #tpu.memory_space<vmem>>, vector<1x8x128xf32>
      %46 = vector.shape_cast %45 : vector<1x8x128xf32> to vector<8x128xf32>
      %47 = vector.shape_cast %44 : vector<8x128xf32> to vector<1x8x128xf32>
      tpu.vector_store %arg6[%c0_34, %c0_35, %c0_36], %47 {strides = array<i32>} : memref<1x8x128xf32, #tpu.memory_space<vmem>>, vector<1x8x128xf32>,
    } else {
    }
    %c0 = arith.constant 0 : index
    %c0_1 = arith.constant 0 : index
    %3 = vector.load %arg2[%c0, %c0_1] : memref<16x128xf32, #tpu.memory_space<vmem>>, vector<16x128xf32>
    %c0_2 = arith.constant 0 : index
    %c0_3 = arith.constant 0 : index
    %4 = vector.load %arg3[%c0_2, %c0_3] : memref<16x128xf32, #tpu.memory_space<vmem>>, vector<16x128xf32>
    %5 = arith.subf %3, %4 : vector<16x128xf32>
    %cst = arith.constant 1.000000e-03 : f32
    %6 = arith.mulf %cst, %cst : f32
    %7 = arith.mulf %5, %5 : vector<16x128xf32>
    %c0_4 = arith.constant 0 : index
    %c0_5 = arith.constant 0 : index
    %c0_6 = arith.constant 0 : index
    %8 = vector.load %arg4[%c0_4, %c0_5, %c0_6] : memref<1x8x128xf32, #tpu.memory_space<vmem>>, vector<1x8x128xf32>
    %9 = vector.shape_cast %8 : vector<1x8x128xf32> to vector<8x128xf32>
    %10 = vector.shape_cast %7 : vector<16x128xf32> to vector<2x8x128xf32>
    %cst_7 = arith.constant dense<0.000000e+00> : vector<8x128xf32>
    %11 = vector.multi_reduction <add>, %10, %cst_7 [0] : vector<2x8x128xf32> to vector<8x128xf32>
    %12 = arith.addf %9, %11 : vector<8x128xf32>
    %c0_8 = arith.constant 0 : index
    %c0_9 = arith.constant 0 : index
    %c0_10 = arith.constant 0 : index
    %13 = vector.load %arg4[%c0_8, %c0_9, %c0_10] : memref<1x8x128xf32, #tpu.memory_space<vmem>>, vector<1x8x128xf32>
    %14 = vector.shape_cast %13 : vector<1x8x128xf32> to vector<8x128xf32>
    %15 = vector.shape_cast %12 : vector<8x128xf32> to vector<1x8x128xf32>
    tpu.vector_store %arg4[%c0_8, %c0_9, %c0_10], %15 {strides = array<i32>} : memref<1x8x128xf32, #tpu.memory_space<vmem>>, vector<1x8x128xf32>,
    %c0_11 = arith.constant 0 : index
    %c0_12 = arith.constant 0 : index
    %c0_13 = arith.constant 0 : index
    %16 = vector.load %arg5[%c0_11, %c0_12, %c0_13] : memref<1x8x128xf32, #tpu.memory_space<vmem>>, vector<1x8x128xf32>
    %17 = vector.shape_cast %16 : vector<1x8x128xf32> to vector<8x128xf32>
    %18 = math.absf %5 : vector<16x128xf32>
    %19 = vector.shape_cast %18 : vector<16x128xf32> to vector<2x8x128xf32>
    %cst_14 = arith.constant dense<0.000000e+00> : vector<8x128xf32>
    %20 = vector.multi_reduction <add>, %19, %cst_14 [0] : vector<2x8x128xf32> to vector<8x128xf32>
    %21 = arith.addf %17, %20 : vector<8x128xf32>
    %c0_15 = arith.constant 0 : index
    %c0_16 = arith.constant 0 : index
    %c0_17 = arith.constant 0 : index
    %22 = vector.load %arg5[%c0_15, %c0_16, %c0_17] : memref<1x8x128xf32, #tpu.memory_space<vmem>>, vector<1x8x128xf32>
    %23 = vector.shape_cast %22 : vector<1x8x128xf32> to vector<8x128xf32>
    %24 = vector.shape_cast %21 : vector<8x128xf32> to vector<1x8x128xf32>
    tpu.vector_store %arg5[%c0_15, %c0_16, %c0_17], %24 {strides = array<i32>} : memref<1x8x128xf32, #tpu.memory_space<vmem>>, vector<1x8x128xf32>,
    %c0_18 = arith.constant 0 : index
    %c0_19 = arith.constant 0 : index
    %c0_20 = arith.constant 0 : index
    %25 = vector.load %arg6[%c0_18, %c0_19, %c0_20] : memref<1x8x128xf32, #tpu.memory_space<vmem>>, vector<1x8x128xf32>
    %26 = vector.shape_cast %25 : vector<1x8x128xf32> to vector<8x128xf32>
    %27 = vector.broadcast %6 : f32 to vector<16x128xf32>
    %28 = arith.addf %7, %27 : vector<16x128xf32>
    %29 = math.sqrt %28 : vector<16x128xf32>
    %30 = vector.shape_cast %29 : vector<16x128xf32> to vector<2x8x128xf32>
    %cst_21 = arith.constant dense<0.000000e+00> : vector<8x128xf32>
    %31 = vector.multi_reduction <add>, %30, %cst_21 [0] : vector<2x8x128xf32> to vector<8x128xf32>
    %32 = arith.addf %26, %31 : vector<8x128xf32>
    %c0_22 = arith.constant 0 : index
    %c0_23 = arith.constant 0 : index
    %c0_24 = arith.constant 0 : index
    %33 = vector.load %arg6[%c0_22, %c0_23, %c0_24] : memref<1x8x128xf32, #tpu.memory_space<vmem>>, vector<1x8x128xf32>
    %34 = vector.shape_cast %33 : vector<1x8x128xf32> to vector<8x128xf32>
    %35 = vector.shape_cast %32 : vector<8x128xf32> to vector<1x8x128xf32>
    tpu.vector_store %arg6[%c0_22, %c0_23, %c0_24], %35 {strides = array<i32>} : memref<1x8x128xf32, #tpu.memory_space<vmem>>, vector<1x8x128xf32>,
    return
  }
  func.func @transform_0(%arg0: i32, %arg1: i32) -> (i32, i32) {
    %c1_i32 = arith.constant 1 : i32
    %0 = arith.muli %arg0, %c1_i32 : i32
    %1 = arith.addi %0, %arg1 : i32
    %c0_i32 = arith.constant 0 : i32
    %c0_i32_0 = arith.constant 0 : i32
    return %1, %c0_i32 : i32, i32
  }
  func.func @transform_1(%arg0: i32, %arg1: i32) -> (i32, i32) {
    %c1_i32 = arith.constant 1 : i32
    %0 = arith.muli %arg0, %c1_i32 : i32
    %1 = arith.addi %0, %arg1 : i32
    %c0_i32 = arith.constant 0 : i32
    %c0_i32_0 = arith.constant 0 : i32
    return %1, %c0_i32 : i32, i32
  }
  func.func @transform_2(%arg0: i32, %arg1: i32) -> (i32, i32, i32) {
    %c0_i32 = arith.constant 0 : i32
    %c0_i32_0 = arith.constant 0 : i32
    %c0_i32_1 = arith.constant 0 : i32
    return %arg0, %c0_i32, %c0_i32_0 : i32, i32, i32
  }
  func.func @transform_3(%arg0: i32, %arg1: i32) -> (i32, i32, i32) {
    %c0_i32 = arith.constant 0 : i32
    %c0_i32_0 = arith.constant 0 : i32
    %c0_i32_1 = arith.constant 0 : i32
    return %arg0, %c0_i32, %c0_i32_0 : i32, i32, i32
  }
  func.func @transform_4(%arg0: i32, %arg1: i32) -> (i32, i32, i32) {
    %c0_i32 = arith.constant 0 : i32
    %c0_i32_0 = arith.constant 0 : i32
    %c0_i32_1 = arith.constant 0 : i32
    return %arg0, %c0_i32, %c0_i32_0 : i32, i32, i32
  }
}

</mosaic_0001>

<llo_original>
// kernel: tpu_custom_call.1
$region0: #{tpu_custom_call.1}
  #allocation0 [shape = 'u32[]', space=smem, size = 0x4, offset = 0x4, fixed_abs, tag = 'smem constant byte address 0x4 - core index']
  #allocation1 [shape = 'u32[144,128]{1,0:T(1,128)}', space=vmem, size = 0x12000, scoped, tag = 'internal scratch']
  %s0 = inlined_call_operand.hbm [shape: f32[16,128], index: 0, kind: input, shape index: {}]
  %s1 = inlined_call_operand.hbm [shape: f32[16,128], index: 1, kind: input, shape index: {}]
  %s2 = inlined_call_operand.hbm [shape: f32[1,8,128], index: 2, kind: output, shape index: {0}]
  %s3 = inlined_call_operand.hbm [shape: f32[1,8,128], index: 3, kind: output, shape index: {1}]
  %s4 = inlined_call_operand.hbm [shape: f32[1,8,128], index: 4, kind: output, shape index: {2}]
  %5 = xla_tuple %s2, %s3, %s4
  %s6 = sld [smem:[#allocation0]]
  $region46: #{tpu_custom_call.1} parent=0
    _
  %s8 = ssub.s32 1, %s6
  %s9 = scalar_select 0, %s8, %s6
  $region1: #{tpu_custom_call.1} parent=0
    #allocation2 [shape = 'u8[8192]{0}', space=vmem, size = 0x2000, scoped, tag = 'input window, operand 0, single buffered']
    #allocation3 [shape = 's32[1]{0}', space=sflag, size = 0x4, scoped, tag = 'scoped memory for tpu_custom_call.1']
    #allocation4 [shape = 's32[1]{0}', space=sflag, size = 0x4, scoped, tag = 'scoped memory for tpu_custom_call.1']
    #allocation5 [shape = 'u8[8192]{0}', space=vmem, size = 0x2000, scoped, tag = 'input window, operand 1, single buffered']
    #allocation6 [shape = 's32[1]{0}', space=sflag, size = 0x4, scoped, tag = 'scoped memory for tpu_custom_call.1']
    #allocation7 [shape = 'u8[4096]{0}', space=vmem, size = 0x1000, scoped, tag = 'output window, operand 0, single buffered']
    #allocation8 [shape = 'u8[4096]{0}', space=vmem, size = 0x1000, scoped, tag = 'output window, operand 1, single buffered']
    #allocation9 [shape = 's32[1]{0}', space=sflag, size = 0x4, scoped, tag = 'scoped memory for tpu_custom_call.1']
    #allocation10 [shape = 'u8[4096]{0}', space=vmem, size = 0x1000, scoped, tag = 'output window, operand 2, single buffered']
    %10 = vsyncpa [#allocation3], 0
    %11 = vsyncpa [#allocation6], 0
    %12 = vsyncpa [#allocation4], 0
    %13 = vsyncpa [#allocation9], 0
    // Predicated region
    $region2: #{tpu_custom_call.1} parent=1 // pred_check
      _
    $region3: #{tpu_custom_call.1} parent=1 // pred_check_branch
      %15 = sbr.rel (0) target = $region5
    $region4: #{tpu_custom_call.1} parent=1 // pred_region
      %s16 = sadd.s32 0, 0
      %s17 = smul.u32 2, %s16
      %s19 = ssub.s32 256, 256
      %20 = vsyncadd [#allocation3], %s19
      %s21 = smul.addr %s17, 128
      %s22 = scalar_lea.hbm %s0, %s21
      %s23 = sshll.u32 [#allocation2], 4
      %s24 = int_to_ptr.vmem [resolvable:$true] %s23
      %29 = dma.hbm_to_vmem [thread:$0]  %s22, 256, %s24, [#allocation3], 128, 128, 8
    $region5: #{tpu_custom_call.1} parent=1 // pred_fallthru
      _
    // Predicated region
    $region6: #{tpu_custom_call.1} parent=1 // pred_check
      _
    $region7: #{tpu_custom_call.1} parent=1 // pred_check_branch
      %31 = sbr.rel (0) target = $region9
    $region8: #{tpu_custom_call.1} parent=1 // pred_region
      %s32 = sadd.s32 0, 0
      %s33 = smul.u32 2, %s32
      %s35 = ssub.s32 256, 256
      %36 = vsyncadd [#allocation6], %s35
      %s37 = smul.addr %s33, 128
      %s38 = scalar_lea.hbm %s1, %s37
      %s39 = sshll.u32 [#allocation5], 4
      %s40 = int_to_ptr.vmem [resolvable:$true] %s39
      %45 = dma.hbm_to_vmem [thread:$0]  %s38, 256, %s40, [#allocation6], 128, 128, 8
    $region9: #{tpu_custom_call.1} parent=1 // pred_fallthru
      _
    // Predicated region
    $region10: #{tpu_custom_call.1} parent=1 // pred_check
      _
    $region11: #{tpu_custom_call.1} parent=1 // pred_check_branch
      %47 = sbr.rel (0) target = $region13
    $region12: #{tpu_custom_call.1} parent=1 // pred_region
      %48 = dma.done [#allocation3], 256
    $region13: #{tpu_custom_call.1} parent=1 // pred_fallthru
      _
    // Predicated region
    $region14: #{tpu_custom_call.1} parent=1 // pred_check
      _
    $region15: #{tpu_custom_call.1} parent=1 // pred_check_branch
      %50 = sbr.rel (0) target = $region17
    $region16: #{tpu_custom_call.1} parent=1 // pred_region
      %51 = dma.done [#allocation6], 256
    $region17: #{tpu_custom_call.1} parent=1 // pred_fallthru
      _
    %s52 = sadd.s32 0, 0
    %s53 = smul.u32 2, %s52
    %s54 = sadd.s32 0, 0
    %s55 = smul.u32 2, %s54
    %p56 = scmp.eq.s32.totalorder 0, 0
    // Predicated region
    $region18: #{tpu_custom_call.1} parent=1 // pred_check
      %p57 = pneg %p56
    $region19: #{tpu_custom_call.1} parent=1 // pred_check_branch
      %59 = sbr.rel (%p57) target = $region21
    $region20: #{tpu_custom_call.1} parent=1 // pred_region
      %60 = vst [vmem:[#allocation7] sm:$0xff] 0.0
      %61 = vst [vmem:[#allocation8] sm:$0xff] 0.0
      %62 = vst [vmem:[#allocation10] sm:$0xff] 0.0
    $region21: #{tpu_custom_call.1} parent=1 // pred_fallthru
      _
    %v63 = vld [vmem:[#allocation2] sm:$0xff]
    %v64 = vld [vmem:[#allocation2 + $0x8] sm:$0xff]
    %v65 = vld [vmem:[#allocation5] sm:$0xff]
    %v66 = vld [vmem:[#allocation5 + $0x8] sm:$0xff]
    %v67 = vsub.f32 %v63, %v65
    %v68 = vsub.f32 %v64, %v66
    %v69 = vmul.f32 %v67, %v67
    %v70 = vmul.f32 %v68, %v68
    %v71 = vld [vmem:[#allocation7] sm:$0xff]
    %v72 = vadd.f32 %v69, %v70
    %v73 = vadd.f32 %v71, %v72
    %74 = vst [vmem:[#allocation7] sm:$0xff] %v73
    %v75 = vld [vmem:[#allocation8] sm:$0xff]
    %v76 = vand.u32 2147483647, %v67
    %v77 = vand.u32 2147483647, %v68
    %v78 = vadd.f32 %v76, %v77
    %v79 = vadd.f32 %v75, %v78
    %80 = vst [vmem:[#allocation8] sm:$0xff] %v79
    %v81 = vld [vmem:[#allocation10] sm:$0xff]
    %v82 = vadd.f32 %v69, 1.0000001e-06
    %v83 = vadd.f32 %v70, 1.0000001e-06
    %v84 = vrsqrt.pop %v82
    %v85 = vmul.f32 %v82, %v84
    %vm86 = vcmp.eq.f32.partialorder %v82, inf
    %v87 = vsel %vm86, %v82, %v85
    %vm88 = vcmp.eq.f32.partialorder %v82, 0.0
    %v89 = vand.u32 %v82, 2147483648
    %v90 = vsel %vm88, %v89, %v87
    %v91 = vrsqrt.pop %v83
    %v92 = vmul.f32 %v83, %v91
    %vm93 = vcmp.eq.f32.partialorder %v83, inf
    %v94 = vsel %vm93, %v83, %v92
    %vm95 = vcmp.eq.f32.partialorder %v83, 0.0
    %v96 = vand.u32 %v83, 2147483648
    %v97 = vsel %vm95, %v96, %v94
    %v98 = vadd.f32 %v90, %v97
    %v99 = vadd.f32 %v81, %v98
    %100 = vst [vmem:[#allocation10] sm:$0xff] %v99
    // Predicated region
    $region22: #{tpu_custom_call.1} parent=1 // pred_check
      _
    $region23: #{tpu_custom_call.1} parent=1 // pred_check_branch
      %102 = sbr.rel (0) target = $region25
    $region24: #{tpu_custom_call.1} parent=1 // pred_region
      %s104 = ssub.s32 128, 128
      %105 = vsyncadd [#allocation4], %s104
      %s107 = sshll.u32 [#allocation7], 4
      %s108 = int_to_ptr.vmem [resolvable:$true] %s107
      %110 = dma.vmem_to_hbm [thread:$0]  %s108, 128, %s2, [#allocation4]
    $region25: #{tpu_custom_call.1} parent=1 // pred_fallthru
      _
    // Predicated region
    $region26: #{tpu_custom_call.1} parent=1 // pred_check
      _
    $region27: #{tpu_custom_call.1} parent=1 // pred_check_branch
      %112 = sbr.rel (0) target = $region29
    $region28: #{tpu_custom_call.1} parent=1 // pred_region
      %s114 = ssub.s32 128, 128
      %115 = vsyncadd [#allocation9], %s114
      %s117 = sshll.u32 [#allocation8], 4
      %s118 = int_to_ptr.vmem [resolvable:$true] %s117
      %120 = dma.vmem_to_hbm [thread:$0]  %s118, 128, %s3, [#allocation9]
    $region29: #{tpu_custom_call.1} parent=1 // pred_fallthru
      _
    // Predicated region
    $region30: #{tpu_custom_call.1} parent=1 // pred_check
      _
    $region31: #{tpu_custom_call.1} parent=1 // pred_check_branch
      %122 = sbr.rel (0) target = $region33
    $region32: #{tpu_custom_call.1} parent=1 // pred_region
      %s124 = ssub.s32 128, 128
      %125 = vsyncadd [#allocation9], %s124
      %s127 = sshll.u32 [#allocation10], 4
      %s128 = int_to_ptr.vmem [resolvable:$true] %s127
      %130 = dma.vmem_to_hbm [thread:$0]  %s128, 128, %s4, [#allocation9]
    $region33: #{tpu_custom_call.1} parent=1 // pred_fallthru
      _
    // Predicated region
    $region34: #{tpu_custom_call.1} parent=1 // pred_check
      _
    $region35: #{tpu_custom_call.1} parent=1 // pred_check_branch
      %132 = sbr.rel (0) target = $region37
    $region36: #{tpu_custom_call.1} parent=1 // pred_region
      %133 = dma.done [#allocation4], 128
    $region37: #{tpu_custom_call.1} parent=1 // pred_fallthru
      _
    // Predicated region
    $region38: #{tpu_custom_call.1} parent=1 // pred_check
      _
    $region39: #{tpu_custom_call.1} parent=1 // pred_check_branch
      %135 = sbr.rel (0) target = $region41
    $region40: #{tpu_custom_call.1} parent=1 // pred_region
      %136 = dma.done [#allocation9], 128
    $region41: #{tpu_custom_call.1} parent=1 // pred_fallthru
      _
    // Predicated region
    $region42: #{tpu_custom_call.1} parent=1 // pred_check
      _
    $region43: #{tpu_custom_call.1} parent=1 // pred_check_branch
      %138 = sbr.rel (0) target = $region45
    $region44: #{tpu_custom_call.1} parent=1 // pred_region
      %139 = dma.done [#allocation9], 128
    $region45: #{tpu_custom_call.1} parent=1 // pred_fallthru
      _
    %140 = vsyncpa [#allocation3], 1
    %141 = vsyncpa [#allocation6], 1
    %142 = vsyncpa [#allocation4], 1
    %143 = vsyncpa [#allocation9], 1

</llo_original>
